<compile_context>
chip_gen: v7x
topology: tpu7x:2x2x1
jax: 0.10.0
libtpu: 0.0.40
codegen_flags: <defaults>
</compile_context>

<pallas_src>
import jax
import jax.numpy as jnp
from jax.experimental import pallas as pl
from jax.experimental.pallas import tpu as pltpu


D_OUT_PAD = 128          # lane-dense padded class axis
NEG_MASK = -1e30         # effectively -inf for the padded logit columns


def mlp_logsoftmax_kernel(x_ref, w1_ref, b1_ref, w2_ref, b2_ref, o_ref):
    # fc1 + ReLU: bf16 operands on the MXU (cast in-kernel, hidden under the
    # MXU/DMA), f32 accumulation, f32 epilogue (v5e has no bf16 VPU/EUP path).
    x = x_ref[...].astype(jnp.bfloat16)                       # (tb, 768)
    h = jnp.dot(x, w1_ref[...], preferred_element_type=jnp.float32)
    h = jnp.maximum(h + b1_ref[...], 0.0)                     # (tb, 256) f32

    # fc2 (padded to 128 output lanes): bf16 operands, f32 accumulation.
    # Padded w2 columns are zero and b2 padding is NEG_MASK, so padded logits
    # come out as NEG_MASK with no extra masking ops.
    logits = jnp.dot(h.astype(jnp.bfloat16), w2_ref[...],
                     preferred_element_type=jnp.float32)
    logits = logits + b2_ref[...]                              # (tb, 128) f32

    # Numerically stable log_softmax over the class axis, all in f32.
    m = jnp.max(logits, axis=-1, keepdims=True)
    shifted = logits - m
    lse = jnp.log(jnp.sum(jnp.exp(shifted), axis=-1, keepdims=True))
    o_ref[...] = (shifted - lse).astype(o_ref.dtype)


def _round_up(x, m):
    return ((x + m - 1) // m) * m


def _choose_tb(B):
    # Large batch tiles (HBM-roofline + fewer ~0.35us grid steps), capped at
    # 512; target >= 4 grid steps when B allows so v7x's two TensorCores each
    # get >= 2 pipelined iterations; tb is a multiple of 16 for bf16 sublane
    # packing of the in-kernel cast, but never larger than the batch itself
    # (rounded up to the f32 sublane multiple of 8).
    tb = min(512, _round_up(max(B // 4, 1), 16))
    tb = max(tb, 16)
    tb = min(tb, _round_up(B, 8))
    return max(tb, 8)


def neural_network_forward(x, w1, b1, w2, b2):
    """x: (B, 768) f32. w1: (768, 256), b1: (256,), w2: (256, 4), b2: (4,)."""
    B, D_in = x.shape
    D_hid = w1.shape[1]
    D_out = w2.shape[1]

    tb = _choose_tb(B)
    B_pad = _round_up(B, tb)

    # x stays f32 (cast to bf16 inside the kernel); pad batch only if needed.
    x_in = x
    if B_pad != B:
        x_in = jnp.pad(x_in, ((0, B_pad - B), (0, 0)))

    w1_bf = w1.astype(jnp.bfloat16)
    w2_bf = jnp.pad(w2, ((0, 0), (0, D_OUT_PAD - D_out))).astype(jnp.bfloat16)
    b1_2d = b1.reshape(1, D_hid).astype(jnp.float32)
    # Fold the padded-class mask into the bias: padded columns get NEG_MASK.
    b2_pad = jnp.concatenate(
        [b2.astype(jnp.float32),
         jnp.full((D_OUT_PAD - D_out,), NEG_MASK, dtype=jnp.float32)])
    b2_2d = b2_pad.reshape(1, D_OUT_PAD)

    grid = (B_pad // tb,)

    cost = pl.CostEstimate(
        flops=2 * B_pad * (D_in * D_hid + D_hid * D_OUT_PAD),
        transcendentals=B_pad * (D_OUT_PAD + 1),
        bytes_accessed=(x_in.size * 4 + w1_bf.size * 2 + w2_bf.size * 2
                        + b1_2d.size * 4 + b2_2d.size * 4
                        + B_pad * D_OUT_PAD * 4),
    )

    out = pl.pallas_call(
        mlp_logsoftmax_kernel,
        out_shape=jax.ShapeDtypeStruct((B_pad, D_OUT_PAD), jnp.float32),
        grid_spec=pl.GridSpec(
            grid=grid,
            in_specs=[
                pl.BlockSpec((tb, D_in), lambda i: (i, 0)),          # x tile
                pl.BlockSpec((D_in, D_hid), lambda i: (0, 0)),       # w1 (resident)
                pl.BlockSpec((1, D_hid), lambda i: (0, 0)),          # b1
                pl.BlockSpec((D_hid, D_OUT_PAD), lambda i: (0, 0)),  # w2 (padded)
                pl.BlockSpec((1, D_OUT_PAD), lambda i: (0, 0)),      # b2 (mask folded)
            ],
            out_specs=pl.BlockSpec((tb, D_OUT_PAD), lambda i: (i, 0)),
        ),
        compiler_params=pltpu.CompilerParams(
            dimension_semantics=("parallel",)),
        cost_estimate=cost,
    )(x_in, w1_bf, b1_2d, w2_bf, b2_2d)

    # Consumers that tolerate the padded slab (argmax / NLL gather) can skip
    # this slice; it is kept here to return the exact torch output shape.
    return out[:B, :D_out]


def reference_forward(x, w1, b1, w2, b2):
    h = jnp.maximum(x @ w1 + b1, 0.0)
    logits = h @ w2 + b2
    return jax.nn.log_softmax(logits, axis=1)


if __name__ == "__main__":
    key = jax.random.PRNGKey(0)
    k_x, k_w1, k_b1, k_w2, k_b2 = jax.random.split(key, 5)

    B, D_in, D_hid, D_out = 8, 768, 256, 4

    x = jax.random.normal(k_x, (B, D_in), dtype=jnp.float32)
    # PyTorch nn.Linear stores (out, in); we generate the transposed (in, out)
    # layout directly, which is what the kernel consumes.
    w1 = jax.random.normal(k_w1, (D_in, D_hid), dtype=jnp.float32) * 0.02
    b1 = jax.random.normal(k_b1, (D_hid,), dtype=jnp.float32) * 0.02
    w2 = jax.random.normal(k_w2, (D_hid, D_out), dtype=jnp.float32) * 0.02
    b2 = jax.random.normal(k_b2, (D_out,), dtype=jnp.float32) * 0.02

    out = neural_network_forward(x, w1, b1, w2, b2)
    out = jax.block_until_ready(out)

    ref = reference_forward(x, w1, b1, w2, b2)
    assert out.shape == (B, D_out)
    # bf16 matmul operands (f32 accumulation) => relaxed tolerance vs f32 ref.
    assert jnp.allclose(out, ref, atol=2e-2, rtol=2e-2)
    # Log-probabilities must normalize per row.
    assert jnp.allclose(jnp.sum(jnp.exp(out), axis=1), 1.0, atol=1e-3)

    print("KERNEL_OK")
</pallas_src>

<mosaic_0001>
module attributes {stable_mosaic.version = 11 : i64} {
  func.func @mlp_logsoftmax_kernel(%arg0: i32, %arg1: memref<8x768xf32, #tpu.memory_space<vmem>>, %arg2: memref<768x256xbf16, #tpu.memory_space<vmem>>, %arg3: memref<1x256xf32, #tpu.memory_space<vmem>>, %arg4: memref<256x128xbf16, #tpu.memory_space<vmem>>, %arg5: memref<1x128xf32, #tpu.memory_space<vmem>>, %arg6: memref<8x128xf32, #tpu.memory_space<vmem>>) attributes {dimension_semantics = [#tpu.dimension_semantics<parallel>], iteration_bounds = array<i64: 1>, scalar_prefetch = 0 : i64, scratch_operands = 0 : i64, tpu.core_type = #tpu.core_type<tc>, window_params = [{transform_indices = @transform_0, window_bounds = array<i64: 8, 768>}, {pipeline_mode = #tpu.pipeline_mode<synchronous>, transform_indices = @transform_1, window_bounds = array<i64: 768, 256>}, {pipeline_mode = #tpu.pipeline_mode<synchronous>, transform_indices = @transform_2, window_bounds = array<i64: 1, 256>}, {pipeline_mode = #tpu.pipeline_mode<synchronous>, transform_indices = @transform_3, window_bounds = array<i64: 256, 128>}, {pipeline_mode = #tpu.pipeline_mode<synchronous>, transform_indices = @transform_4, window_bounds = array<i64: 1, 128>}, {transform_indices = @transform_5, window_bounds = array<i64: 8, 128>}]} {
    %c0 = arith.constant 0 : index
    %c0_0 = arith.constant 0 : index
    %0 = vector.load %arg1[%c0, %c0_0] : memref<8x768xf32, #tpu.memory_space<vmem>>, vector<8x768xf32>
    %1 = arith.truncf %0 : vector<8x768xf32> to vector<8x768xbf16>
    %c0_1 = arith.constant 0 : index
    %c0_2 = arith.constant 0 : index
    %2 = vector.load %arg2[%c0_1, %c0_2] : memref<768x256xbf16, #tpu.memory_space<vmem>>, vector<768x256xbf16>
    %cst = arith.constant dense<0.000000e+00> : vector<8x256xf32>
    %3 = tpu.matmul %1, %2, %cst {dimension_numbers = #tpu.dot_dimension_numbers<[1], [0], [0], [1], [0, 0, 1, 1], [], []>} : vector<8x768xbf16>, vector<768x256xbf16>, vector<8x256xf32> -> vector<8x256xf32>
    %c0_3 = arith.constant 0 : index
    %c0_4 = arith.constant 0 : index
    %4 = vector.load %arg3[%c0_3, %c0_4] : memref<1x256xf32, #tpu.memory_space<vmem>>, vector<1x256xf32>
    %5 = vector.broadcast %4 : vector<1x256xf32> to vector<8x256xf32>
    %6 = arith.addf %3, %5 : vector<8x256xf32>
    %cst_5 = arith.constant 0.000000e+00 : f32
    %7 = vector.broadcast %cst_5 : f32 to vector<8x256xf32>
    %8 = arith.maximumf %6, %7 : vector<8x256xf32>
    %9 = arith.truncf %8 : vector<8x256xf32> to vector<8x256xbf16>
    %c0_6 = arith.constant 0 : index
    %c0_7 = arith.constant 0 : index
    %10 = vector.load %arg4[%c0_6, %c0_7] : memref<256x128xbf16, #tpu.memory_space<vmem>>, vector<256x128xbf16>
    %cst_8 = arith.constant dense<0.000000e+00> : vector<8x128xf32>
    %11 = tpu.matmul %9, %10, %cst_8 {dimension_numbers = #tpu.dot_dimension_numbers<[1], [0], [0], [1], [0, 0, 1, 1], [], []>} : vector<8x256xbf16>, vector<256x128xbf16>, vector<8x128xf32> -> vector<8x128xf32>
    %c0_9 = arith.constant 0 : index
    %c0_10 = arith.constant 0 : index
    %12 = vector.load %arg5[%c0_9, %c0_10] : memref<1x128xf32, #tpu.memory_space<vmem>>, vector<1x128xf32>
    %13 = vector.broadcast %12 : vector<1x128xf32> to vector<8x128xf32>
    %14 = arith.addf %11, %13 : vector<8x128xf32>
    %cst_11 = arith.constant dense<0xFF800000> : vector<8xf32>
    %15 = vector.multi_reduction <maximumf>, %14, %cst_11 [1] : vector<8x128xf32> to vector<8xf32>
    %16 = vector.shape_cast %15 : vector<8xf32> to vector<8x1xf32>
    %17 = vector.broadcast %16 : vector<8x1xf32> to vector<8x128xf32>
    %18 = arith.subf %14, %17 : vector<8x128xf32>
    %19 = math.exp %18 : vector<8x128xf32>
    %cst_12 = arith.constant dense<0.000000e+00> : vector<8xf32>
    %20 = vector.multi_reduction <add>, %19, %cst_12 [1] : vector<8x128xf32> to vector<8xf32>
    %21 = vector.shape_cast %20 : vector<8xf32> to vector<8x1xf32>
    %22 = math.log %21 : vector<8x1xf32>
    %23 = vector.broadcast %22 : vector<8x1xf32> to vector<8x128xf32>
    %24 = arith.subf %18, %23 : vector<8x128xf32>
    %c0_13 = arith.constant 0 : index
    %c0_14 = arith.constant 0 : index
    %25 = vector.load %arg6[%c0_13, %c0_14] : memref<8x128xf32, #tpu.memory_space<vmem>>, vector<8x128xf32>
    tpu.vector_store %arg6[%c0_13, %c0_14], %24 {strides = array<i32>} : memref<8x128xf32, #tpu.memory_space<vmem>>, vector<8x128xf32>,
    return
  }
  func.func @transform_0(%arg0: i32) -> (i32, i32) {
    %c0_i32 = arith.constant 0 : i32
    %c0_i32_0 = arith.constant 0 : i32
    return %arg0, %c0_i32 : i32, i32
  }
  func.func @transform_1(%arg0: i32) -> (i32, i32) {
    %c0_i32 = arith.constant 0 : i32
    %c0_i32_0 = arith.constant 0 : i32
    %c0_i32_1 = arith.constant 0 : i32
    return %c0_i32, %c0_i32_0 : i32, i32
  }
  func.func @transform_2(%arg0: i32) -> (i32, i32) {
    %c0_i32 = arith.constant 0 : i32
    %c0_i32_0 = arith.constant 0 : i32
    %c0_i32_1 = arith.constant 0 : i32
    return %c0_i32, %c0_i32_0 : i32, i32
  }
  func.func @transform_3(%arg0: i32) -> (i32, i32) {
    %c0_i32 = arith.constant 0 : i32
    %c0_i32_0 = arith.constant 0 : i32
    %c0_i32_1 = arith.constant 0 : i32
    return %c0_i32, %c0_i32_0 : i32, i32
  }
  func.func @transform_4(%arg0: i32) -> (i32, i32) {
    %c0_i32 = arith.constant 0 : i32
    %c0_i32_0 = arith.constant 0 : i32
    %c0_i32_1 = arith.constant 0 : i32
    return %c0_i32, %c0_i32_0 : i32, i32
  }
  func.func @transform_5(%arg0: i32) -> (i32, i32) {
    %c0_i32 = arith.constant 0 : i32
    %c0_i32_0 = arith.constant 0 : i32
    return %arg0, %c0_i32 : i32, i32
  }
}

</mosaic_0001>

<llo_original>
// kernel: tpu_custom_call.1
$region0: #{tpu_custom_call.1}
  #allocation0 [shape = 'u32[]', space=smem, size = 0x4, offset = 0x4, fixed_abs, tag = 'smem constant byte address 0x4 - core index']
  #allocation1 [shape = 'u32[144,128]{1,0:T(1,128)}', space=vmem, size = 0x12000, scoped, tag = 'internal scratch']
  %s0 = inlined_call_operand.hbm [shape: f32[8,768], index: 0, kind: input, shape index: {}]
  %s1 = inlined_call_operand.hbm [shape: bf16[768,256], index: 1, kind: input, shape index: {}]
  %s2 = inlined_call_operand.vmem [shape: f32[1,256], index: 2, kind: input, shape index: {}]
  %s3 = inlined_call_operand.hbm [shape: bf16[256,128], index: 3, kind: input, shape index: {}]
  %s4 = inlined_call_operand.vmem [shape: f32[1,128], index: 4, kind: input, shape index: {}]
  %s5 = inlined_call_operand.hbm [shape: f32[8,128], index: 5, kind: output, shape index: {}]
  %s6 = sld [smem:[#allocation0]]
  $region42: #{tpu_custom_call.1} parent=0
    _
  %s8 = ssub.s32 1, %s6
  %s9 = scalar_select 0, %s8, %s6
  $region1: #{tpu_custom_call.1} parent=0
    #allocation2 [shape = 'u8[24576]{0}', space=vmem, size = 0x6000, scoped, tag = 'input window, operand 0, single buffered']
    #allocation3 [shape = 's32[1]{0}', space=sflag, size = 0x4, scoped, tag = 'scoped memory for tpu_custom_call.1']
    #allocation4 [shape = 's32[1]{0}', space=sflag, size = 0x4, scoped, tag = 'scoped memory for tpu_custom_call.1']
    #allocation5 [shape = 'u8[393216]{0}', space=vmem, size = 0x60000, scoped, tag = 'input window, operand 1, single buffered']
    #allocation6 [shape = 's32[1]{0}', space=sflag, size = 0x4, scoped, tag = 'scoped memory for tpu_custom_call.1']
    #allocation7 [shape = 'u8[65536]{0}', space=vmem, size = 0x10000, scoped, tag = 'input window, operand 3, single buffered']
    #allocation8 [shape = 'u8[4096]{0}', space=vmem, size = 0x1000, scoped, tag = 'output window, operand 0, single buffered']
    %10 = vsyncpa [#allocation3], 0
    %11 = vsyncpa [#allocation6], 0
    %12 = vsyncpa [#allocation4], 0
    // Predicated region
    $region2: #{tpu_custom_call.1} parent=1 // pred_check
      _
    $region3: #{tpu_custom_call.1} parent=1 // pred_check_branch
      %14 = sbr.rel (0) target = $region5
    $region4: #{tpu_custom_call.1} parent=1 // pred_region
      %s16 = ssub.s32 768, 768
      %17 = vsyncadd [#allocation3], %s16
      %s19 = sshll.u32 [#allocation2], 4
      %s20 = int_to_ptr.vmem [resolvable:$true] %s19
      %22 = dma.hbm_to_vmem [thread:$0]  %s0, 768, %s20, [#allocation3]
    $region5: #{tpu_custom_call.1} parent=1 // pred_fallthru
      _
    // Predicated region
    $region6: #{tpu_custom_call.1} parent=1 // pred_check
      _
    $region7: #{tpu_custom_call.1} parent=1 // pred_check_branch
      %24 = sbr.rel (0) target = $region9
    $region8: #{tpu_custom_call.1} parent=1 // pred_region
      %s26 = ssub.s32 12288, 12288
      %27 = vsyncadd [#allocation6], %s26
      %s28 = sshll.u32 [#allocation5], 4
      %s29 = int_to_ptr.vmem [resolvable:$true] %s28
      %34 = dma.hbm_to_vmem [thread:$0]  %s1, 12288, %s29, [#allocation6], 128, 128, 8
    $region9: #{tpu_custom_call.1} parent=1 // pred_fallthru
      _
    // Predicated region
    $region10: #{tpu_custom_call.1} parent=1 // pred_check
      _
    $region11: #{tpu_custom_call.1} parent=1 // pred_check_branch
      %36 = sbr.rel (0) target = $region13
    $region12: #{tpu_custom_call.1} parent=1 // pred_region
      _
    $region13: #{tpu_custom_call.1} parent=1 // pred_fallthru
      _
    // Predicated region
    $region14: #{tpu_custom_call.1} parent=1 // pred_check
      _
    $region15: #{tpu_custom_call.1} parent=1 // pred_check_branch
      %38 = sbr.rel (0) target = $region17
    $region16: #{tpu_custom_call.1} parent=1 // pred_region
      %s40 = ssub.s32 2048, 2048
      %41 = vsyncadd [#allocation6], %s40
      %s42 = sshll.u32 [#allocation7], 4
      %s43 = int_to_ptr.vmem [resolvable:$true] %s42
      %48 = dma.hbm_to_vmem [thread:$0]  %s3, 2048, %s43, [#allocation6], 64, 64, 4
    $region17: #{tpu_custom_call.1} parent=1 // pred_fallthru
      _
    // Predicated region
    $region18: #{tpu_custom_call.1} parent=1 // pred_check
      _
    $region19: #{tpu_custom_call.1} parent=1 // pred_check_branch
      %50 = sbr.rel (0) target = $region21
    $region20: #{tpu_custom_call.1} parent=1 // pred_region
      _
    $region21: #{tpu_custom_call.1} parent=1 // pred_fallthru
      _
    // Predicated region
    $region22: #{tpu_custom_call.1} parent=1 // pred_check
      _
    $region23: #{tpu_custom_call.1} parent=1 // pred_check_branch
      %52 = sbr.rel (0) target = $region25
    $region24: #{tpu_custom_call.1} parent=1 // pred_region
      %53 = dma.done [#allocation3], 768
    $region25: #{tpu_custom_call.1} parent=1 // pred_fallthru
      _
    // Predicated region
    $region26: #{tpu_custom_call.1} parent=1 // pred_check
      _
    $region27: #{tpu_custom_call.1} parent=1 // pred_check_branch
      %55 = sbr.rel (0) target = $region29
    $region28: #{tpu_custom_call.1} parent=1 // pred_region
      %56 = dma.done [#allocation6], 12288
    $region29: #{tpu_custom_call.1} parent=1 // pred_fallthru
      _
    // Predicated region
    $region30: #{tpu_custom_call.1} parent=1 // pred_check
      _
    $region31: #{tpu_custom_call.1} parent=1 // pred_check_branch
      %58 = sbr.rel (0) target = $region33
    $region32: #{tpu_custom_call.1} parent=1 // pred_region
      %59 = dma.done [#allocation6], 2048
    $region33: #{tpu_custom_call.1} parent=1 // pred_fallthru
      _
    %v61 = vld [vmem:[#allocation2] sm:$0xff]
    %v62 = vld [vmem:[#allocation2 + $0x8] sm:$0xff]
    %v63 = vld [vmem:[#allocation2 + $0x10] sm:$0xff]
    %v64 = vld [vmem:[#allocation2 + $0x18] sm:$0xff]
    %v65 = vld [vmem:[#allocation2 + $0x20] sm:$0xff]
    %v66 = vld [vmem:[#allocation2 + $0x28] sm:$0xff]
    %v67 = vpack.c.bf16 %v61, %v61
    %v68 = vpack.c.bf16 %v62, %v62
    %v69 = vpack.c.bf16 %v63, %v63
    %v70 = vpack.c.bf16 %v64, %v64
    %v71 = vpack.c.bf16 %v65, %v65
    %v72 = vpack.c.bf16 %v66, %v66
    %v73 = vld [vmem:[#allocation5] sm:$0xff]
    %v74 = vld [vmem:[#allocation5 + $0x8] sm:$0xff]
    %v75 = vld [vmem:[#allocation5 + $0x10] sm:$0xff]
    %v76 = vld [vmem:[#allocation5 + $0x18] sm:$0xff]
    %v77 = vld [vmem:[#allocation5 + $0x20] sm:$0xff]
    %v78 = vld [vmem:[#allocation5 + $0x28] sm:$0xff]
    %v79 = vld [vmem:[#allocation5 + $0x30] sm:$0xff]
    %v80 = vld [vmem:[#allocation5 + $0x38] sm:$0xff]
    %v81 = vld [vmem:[#allocation5 + $0x40] sm:$0xff]
    %v82 = vld [vmem:[#allocation5 + $0x48] sm:$0xff]
    %v83 = vld [vmem:[#allocation5 + $0x50] sm:$0xff]
    %v84 = vld [vmem:[#allocation5 + $0x58] sm:$0xff]
    %v85 = vld [vmem:[#allocation5 + $0x60] sm:$0xff]
    %v86 = vld [vmem:[#allocation5 + $0x68] sm:$0xff]
    %v87 = vld [vmem:[#allocation5 + $0x70] sm:$0xff]
    %v88 = vld [vmem:[#allocation5 + $0x78] sm:$0xff]
    %v89 = vld [vmem:[#allocation5 + $0x80] sm:$0xff]
    %v90 = vld [vmem:[#allocation5 + $0x88] sm:$0xff]
    %v91 = vld [vmem:[#allocation5 + $0x90] sm:$0xff]
    %v92 = vld [vmem:[#allocation5 + $0x98] sm:$0xff]
    %v93 = vld [vmem:[#allocation5 + $0xa0] sm:$0xff]
    %v94 = vld [vmem:[#allocation5 + $0xa8] sm:$0xff]
    %v95 = vld [vmem:[#allocation5 + $0xb0] sm:$0xff]
    %v96 = vld [vmem:[#allocation5 + $0xb8] sm:$0xff]
    %v97 = vld [vmem:[#allocation5 + $0xc0] sm:$0xff]
    %v98 = vld [vmem:[#allocation5 + $0xc8] sm:$0xff]
    %v99 = vld [vmem:[#allocation5 + $0xd0] sm:$0xff]
    %v100 = vld [vmem:[#allocation5 + $0xd8] sm:$0xff]
    %v101 = vld [vmem:[#allocation5 + $0xe0] sm:$0xff]
    %v102 = vld [vmem:[#allocation5 + $0xe8] sm:$0xff]
    %v103 = vld [vmem:[#allocation5 + $0xf0] sm:$0xff]
    %v104 = vld [vmem:[#allocation5 + $0xf8] sm:$0xff]
    %v105 = vld [vmem:[#allocation5 + $0x100] sm:$0xff]
    %v106 = vld [vmem:[#allocation5 + $0x108] sm:$0xff]
    %v107 = vld [vmem:[#allocation5 + $0x110] sm:$0xff]
    %v108 = vld [vmem:[#allocation5 + $0x118] sm:$0xff]
    %v109 = vld [vmem:[#allocation5 + $0x120] sm:$0xff]
    %v110 = vld [vmem:[#allocation5 + $0x128] sm:$0xff]
    %v111 = vld [vmem:[#allocation5 + $0x130] sm:$0xff]
    %v112 = vld [vmem:[#allocation5 + $0x138] sm:$0xff]
    %v113 = vld [vmem:[#allocation5 + $0x140] sm:$0xff]
    %v114 = vld [vmem:[#allocation5 + $0x148] sm:$0xff]
    %v115 = vld [vmem:[#allocation5 + $0x150] sm:$0xff]
    %v116 = vld [vmem:[#allocation5 + $0x158] sm:$0xff]
    %v117 = vld [vmem:[#allocation5 + $0x160] sm:$0xff]
    %v118 = vld [vmem:[#allocation5 + $0x168] sm:$0xff]
    %v119 = vld [vmem:[#allocation5 + $0x170] sm:$0xff]
    %v120 = vld [vmem:[#allocation5 + $0x178] sm:$0xff]
    %v121 = vld [vmem:[#allocation5 + $0x180] sm:$0xff]
    %v122 = vld [vmem:[#allocation5 + $0x188] sm:$0xff]
    %v123 = vld [vmem:[#allocation5 + $0x190] sm:$0xff]
    %v124 = vld [vmem:[#allocation5 + $0x198] sm:$0xff]
    %v125 = vld [vmem:[#allocation5 + $0x1a0] sm:$0xff]
    %v126 = vld [vmem:[#allocation5 + $0x1a8] sm:$0xff]
    %v127 = vld [vmem:[#allocation5 + $0x1b0] sm:$0xff]
    %v128 = vld [vmem:[#allocation5 + $0x1b8] sm:$0xff]
    %v129 = vld [vmem:[#allocation5 + $0x1c0] sm:$0xff]
    %v130 = vld [vmem:[#allocation5 + $0x1c8] sm:$0xff]
    %v131 = vld [vmem:[#allocation5 + $0x1d0] sm:$0xff]
    %v132 = vld [vmem:[#allocation5 + $0x1d8] sm:$0xff]
    %v133 = vld [vmem:[#allocation5 + $0x1e0] sm:$0xff]
    %v134 = vld [vmem:[#allocation5 + $0x1e8] sm:$0xff]
    %v135 = vld [vmem:[#allocation5 + $0x1f0] sm:$0xff]
    %v136 = vld [vmem:[#allocation5 + $0x1f8] sm:$0xff]
    %v137 = vld [vmem:[#allocation5 + $0x200] sm:$0xff]
    %v138 = vld [vmem:[#allocation5 + $0x208] sm:$0xff]
    %v139 = vld [vmem:[#allocation5 + $0x210] sm:$0xff]
    %v140 = vld [vmem:[#allocation5 + $0x218] sm:$0xff]
    %v141 = vld [vmem:[#allocation5 + $0x220] sm:$0xff]
    %v142 = vld [vmem:[#allocation5 + $0x228] sm:$0xff]
    %v143 = vld [vmem:[#allocation5 + $0x230] sm:$0xff]
    %v144 = vld [vmem:[#allocation5 + $0x238] sm:$0xff]
    %v145 = vld [vmem:[#allocation5 + $0x240] sm:$0xff]
    %v146 = vld [vmem:[#allocation5 + $0x248] sm:$0xff]
    %v147 = vld [vmem:[#allocation5 + $0x250] sm:$0xff]
    %v148 = vld [vmem:[#allocation5 + $0x258] sm:$0xff]
    %v149 = vld [vmem:[#allocation5 + $0x260] sm:$0xff]
    %v150 = vld [vmem:[#allocation5 + $0x268] sm:$0xff]
    %v151 = vld [vmem:[#allocation5 + $0x270] sm:$0xff]
    %v152 = vld [vmem:[#allocation5 + $0x278] sm:$0xff]
    %v153 = vld [vmem:[#allocation5 + $0x280] sm:$0xff]
    %v154 = vld [vmem:[#allocation5 + $0x288] sm:$0xff]
    %v155 = vld [vmem:[#allocation5 + $0x290] sm:$0xff]
    %v156 = vld [vmem:[#allocation5 + $0x298] sm:$0xff]
    %v157 = vld [vmem:[#allocation5 + $0x2a0] sm:$0xff]
    %v158 = vld [vmem:[#allocation5 + $0x2a8] sm:$0xff]
    %v159 = vld [vmem:[#allocation5 + $0x2b0] sm:$0xff]
    %v160 = vld [vmem:[#allocation5 + $0x2b8] sm:$0xff]
    %v161 = vld [vmem:[#allocation5 + $0x2c0] sm:$0xff]
    %v162 = vld [vmem:[#allocation5 + $0x2c8] sm:$0xff]
    %v163 = vld [vmem:[#allocation5 + $0x2d0] sm:$0xff]
    %v164 = vld [vmem:[#allocation5 + $0x2d8] sm:$0xff]
    %v165 = vld [vmem:[#allocation5 + $0x2e0] sm:$0xff]
    %v166 = vld [vmem:[#allocation5 + $0x2e8] sm:$0xff]
    %v167 = vld [vmem:[#allocation5 + $0x2f0] sm:$0xff]
    %v168 = vld [vmem:[#allocation5 + $0x2f8] sm:$0xff]
    %v169 = vld [vmem:[%s2] sm:$0x3]
    %v171 = vlaneseq
    %v172 = vshrl.u32 %v171, 7
    %v173 = vsub.s32 0, %v172
    %v174 = vrot.slane %v169, %v173
    %v175 = vlaneseq
    %v176 = vshrl.u32 %v175, 7
    %v177 = vsub.s32 1, %v176
    %v178 = vrot.slane %v169, %v177
    %v277 = vunpack.c.l.b16 %v73
    %v278 = vunpack.c.h.b16 %v73
    %v279 = vunpack.c.l.b16 %v74
    %v280 = vunpack.c.h.b16 %v74
    %v281 = vunpack.c.l.b16 %v75
    %v282 = vunpack.c.h.b16 %v75
    %v283 = vunpack.c.l.b16 %v76
    %v284 = vunpack.c.h.b16 %v76
    %v285 = vunpack.c.l.b16 %v77
    %v286 = vunpack.c.h.b16 %v77
    %v287 = vunpack.c.l.b16 %v78
    %v288 = vunpack.c.h.b16 %v78
    %v289 = vunpack.c.l.b16 %v79
    %v290 = vunpack.c.h.b16 %v79
    %v291 = vunpack.c.l.b16 %v80
    %v292 = vunpack.c.h.b16 %v80
    %v293 = vunpack.c.l.b16 %v81
    %v294 = vunpack.c.h.b16 %v81
    %v295 = vunpack.c.l.b16 %v82
    %v296 = vunpack.c.h.b16 %v82
    %v297 = vunpack.c.l.b16 %v83
    %v298 = vunpack.c.h.b16 %v83
    %v299 = vunpack.c.l.b16 %v84
    %v300 = vunpack.c.h.b16 %v84
    %v301 = vunpack.c.l.b16 %v85
    %v302 = vunpack.c.h.b16 %v85
    %v303 = vunpack.c.l.b16 %v86
    %v304 = vunpack.c.h.b16 %v86
    %v305 = vunpack.c.l.b16 %v87
    %v306 = vunpack.c.h.b16 %v87
    %v307 = vunpack.c.l.b16 %v88
    %v308 = vunpack.c.h.b16 %v88
    %v309 = vunpack.c.l.b16 %v89
    %v310 = vunpack.c.h.b16 %v89
    %v311 = vunpack.c.l.b16 %v90
    %v312 = vunpack.c.h.b16 %v90
    %v313 = vunpack.c.l.b16 %v91
    %v314 = vunpack.c.h.b16 %v91
    %v315 = vunpack.c.l.b16 %v92
    %v316 = vunpack.c.h.b16 %v92
    %v317 = vunpack.c.l.b16 %v93
    %v318 = vunpack.c.h.b16 %v93
    %v319 = vunpack.c.l.b16 %v94
    %v320 = vunpack.c.h.b16 %v94
    %v321 = vunpack.c.l.b16 %v95
    %v322 = vunpack.c.h.b16 %v95
    %v323 = vunpack.c.l.b16 %v96
    %v324 = vunpack.c.h.b16 %v96
    %v325 = vunpack.c.l.b16 %v97
    %v326 = vunpack.c.h.b16 %v97
    %v327 = vunpack.c.l.b16 %v98
    %v328 = vunpack.c.h.b16 %v98
    %v329 = vunpack.c.l.b16 %v99
    %v330 = vunpack.c.h.b16 %v99
    %v331 = vunpack.c.l.b16 %v100
    %v332 = vunpack.c.h.b16 %v100
    %v333 = vunpack.c.l.b16 %v101
    %v334 = vunpack.c.h.b16 %v101
    %v335 = vunpack.c.l.b16 %v102
    %v336 = vunpack.c.h.b16 %v102
    %v337 = vunpack.c.l.b16 %v103
    %v338 = vunpack.c.h.b16 %v103
    %v339 = vunpack.c.l.b16 %v104
    %v340 = vunpack.c.h.b16 %v104
    %v341 = vunpack.c.l.b16 %v105
    %v342 = vunpack.c.h.b16 %v105
    %v343 = vunpack.c.l.b16 %v106
    %v344 = vunpack.c.h.b16 %v106
    %v345 = vunpack.c.l.b16 %v107
    %v346 = vunpack.c.h.b16 %v107
    %v347 = vunpack.c.l.b16 %v108
    %v348 = vunpack.c.h.b16 %v108
    %v349 = vunpack.c.l.b16 %v109
    %v350 = vunpack.c.h.b16 %v109
    %v351 = vunpack.c.l.b16 %v110
    %v352 = vunpack.c.h.b16 %v110
    %v353 = vunpack.c.l.b16 %v111
    %v354 = vunpack.c.h.b16 %v111
    %v355 = vunpack.c.l.b16 %v112
    %v356 = vunpack.c.h.b16 %v112
    %v357 = vunpack.c.l.b16 %v113
    %v358 = vunpack.c.h.b16 %v113
    %v359 = vunpack.c.l.b16 %v114
    %v360 = vunpack.c.h.b16 %v114
    %v361 = vunpack.c.l.b16 %v115
    %v362 = vunpack.c.h.b16 %v115
    %v363 = vunpack.c.l.b16 %v116
    %v364 = vunpack.c.h.b16 %v116
    %v365 = vunpack.c.l.b16 %v117
    %v366 = vunpack.c.h.b16 %v117
    %v367 = vunpack.c.l.b16 %v118
    %v368 = vunpack.c.h.b16 %v118
    %v369 = vunpack.c.l.b16 %v119
    %v370 = vunpack.c.h.b16 %v119
    %v371 = vunpack.c.l.b16 %v120
    %v372 = vunpack.c.h.b16 %v120
    %v373 = vunpack.c.l.b16 %v121
    %v374 = vunpack.c.h.b16 %v121
    %v375 = vunpack.c.l.b16 %v122
    %v376 = vunpack.c.h.b16 %v122
    %v377 = vunpack.c.l.b16 %v123
    %v378 = vunpack.c.h.b16 %v123
    %v379 = vunpack.c.l.b16 %v124
    %v380 = vunpack.c.h.b16 %v124
    %v381 = vunpack.c.l.b16 %v125
    %v382 = vunpack.c.h.b16 %v125
    %v383 = vunpack.c.l.b16 %v126
    %v384 = vunpack.c.h.b16 %v126
    %v385 = vunpack.c.l.b16 %v127
    %v386 = vunpack.c.h.b16 %v127
    %v387 = vunpack.c.l.b16 %v128
    %v388 = vunpack.c.h.b16 %v128
    %v389 = vunpack.c.l.b16 %v129
    %v390 = vunpack.c.h.b16 %v129
    %v391 = vunpack.c.l.b16 %v130
    %v392 = vunpack.c.h.b16 %v130
    %v393 = vunpack.c.l.b16 %v131
    %v394 = vunpack.c.h.b16 %v131
    %v395 = vunpack.c.l.b16 %v132
    %v396 = vunpack.c.h.b16 %v132
    %v397 = vunpack.c.l.b16 %v133
    %v398 = vunpack.c.h.b16 %v133
    %v399 = vunpack.c.l.b16 %v134
    %v400 = vunpack.c.h.b16 %v134
    %v401 = vunpack.c.l.b16 %v135
    %v402 = vunpack.c.h.b16 %v135
    %v403 = vunpack.c.l.b16 %v136
    %v404 = vunpack.c.h.b16 %v136
    %v405 = vunpack.c.l.b16 %v137
    %v406 = vunpack.c.h.b16 %v137
    %v407 = vunpack.c.l.b16 %v138
    %v408 = vunpack.c.h.b16 %v138
    %v409 = vunpack.c.l.b16 %v139
    %v410 = vunpack.c.h.b16 %v139
    %v411 = vunpack.c.l.b16 %v140
    %v412 = vunpack.c.h.b16 %v140
    %v413 = vunpack.c.l.b16 %v141
    %v414 = vunpack.c.h.b16 %v141
    %v415 = vunpack.c.l.b16 %v142
    %v416 = vunpack.c.h.b16 %v142
    %v417 = vunpack.c.l.b16 %v143
    %v418 = vunpack.c.h.b16 %v143
    %v419 = vunpack.c.l.b16 %v144
    %v420 = vunpack.c.h.b16 %v144
    %v421 = vunpack.c.l.b16 %v145
    %v422 = vunpack.c.h.b16 %v145
    %v423 = vunpack.c.l.b16 %v146
    %v424 = vunpack.c.h.b16 %v146
    %v425 = vunpack.c.l.b16 %v147
    %v426 = vunpack.c.h.b16 %v147
    %v427 = vunpack.c.l.b16 %v148
    %v428 = vunpack.c.h.b16 %v148
    %v429 = vunpack.c.l.b16 %v149
    %v430 = vunpack.c.h.b16 %v149
    %v431 = vunpack.c.l.b16 %v150
    %v432 = vunpack.c.h.b16 %v150
    %v433 = vunpack.c.l.b16 %v151
    %v434 = vunpack.c.h.b16 %v151
    %v435 = vunpack.c.l.b16 %v152
    %v436 = vunpack.c.h.b16 %v152
    %v437 = vunpack.c.l.b16 %v153
    %v438 = vunpack.c.h.b16 %v153
    %v439 = vunpack.c.l.b16 %v154
    %v440 = vunpack.c.h.b16 %v154
    %v441 = vunpack.c.l.b16 %v155
    %v442 = vunpack.c.h.b16 %v155
    %v443 = vunpack.c.l.b16 %v156
    %v444 = vunpack.c.h.b16 %v156
    %v445 = vunpack.c.l.b16 %v157
    %v446 = vunpack.c.h.b16 %v157
    %v447 = vunpack.c.l.b16 %v158
    %v448 = vunpack.c.h.b16 %v158
    %v449 = vunpack.c.l.b16 %v159
    %v450 = vunpack.c.h.b16 %v159
    %v451 = vunpack.c.l.b16 %v160
    %v452 = vunpack.c.h.b16 %v160
    %v453 = vunpack.c.l.b16 %v161
    %v454 = vunpack.c.h.b16 %v161
    %v455 = vunpack.c.l.b16 %v162
    %v456 = vunpack.c.h.b16 %v162
    %v457 = vunpack.c.l.b16 %v163
    %v458 = vunpack.c.h.b16 %v163
    %v459 = vunpack.c.l.b16 %v164
    %v460 = vunpack.c.h.b16 %v164
    %v461 = vunpack.c.l.b16 %v165
    %v462 = vunpack.c.h.b16 %v165
    %v463 = vunpack.c.l.b16 %v166
    %v464 = vunpack.c.h.b16 %v166
    %v465 = vunpack.c.l.b16 %v167
    %v466 = vunpack.c.h.b16 %v167
    %v467 = vunpack.c.l.b16 %v168
    %v468 = vunpack.c.h.b16 %v168
    %v469 = vpack.c.b16 %v279, %v277
    %v470 = vpack.c.b16 %v280, %v278
    %v471 = vpack.c.b16 %v283, %v281
    %v472 = vpack.c.b16 %v284, %v282
    %v473 = vpack.c.b16 %v287, %v285
    %v474 = vpack.c.b16 %v288, %v286
    %v475 = vpack.c.b16 %v291, %v289
    %v476 = vpack.c.b16 %v292, %v290
    %v477 = vpack.c.b16 %v295, %v293
    %v478 = vpack.c.b16 %v296, %v294
    %v479 = vpack.c.b16 %v299, %v297
    %v480 = vpack.c.b16 %v300, %v298
    %v481 = vpack.c.b16 %v303, %v301
    %v482 = vpack.c.b16 %v304, %v302
    %v483 = vpack.c.b16 %v307, %v305
    %v484 = vpack.c.b16 %v308, %v306
    %v485 = vpack.c.b16 %v311, %v309
    %v486 = vpack.c.b16 %v312, %v310
    %v487 = vpack.c.b16 %v315, %v313
    %v488 = vpack.c.b16 %v316, %v314
    %v489 = vpack.c.b16 %v319, %v317
    %v490 = vpack.c.b16 %v320, %v318
    %v491 = vpack.c.b16 %v323, %v321
    %v492 = vpack.c.b16 %v324, %v322
    %v493 = vpack.c.b16 %v327, %v325
    %v494 = vpack.c.b16 %v328, %v326
    %v495 = vpack.c.b16 %v331, %v329
    %v496 = vpack.c.b16 %v332, %v330
    %v497 = vpack.c.b16 %v335, %v333
    %v498 = vpack.c.b16 %v336, %v334
    %v499 = vpack.c.b16 %v339, %v337
    %v500 = vpack.c.b16 %v340, %v338
    %v501 = vpack.c.b16 %v343, %v341
    %v502 = vpack.c.b16 %v344, %v342
    %v503 = vpack.c.b16 %v347, %v345
    %v504 = vpack.c.b16 %v348, %v346
    %v505 = vpack.c.b16 %v351, %v349
    %v506 = vpack.c.b16 %v352, %v350
    %v507 = vpack.c.b16 %v355, %v353
    %v508 = vpack.c.b16 %v356, %v354
    %v509 = vpack.c.b16 %v359, %v357
    %v510 = vpack.c.b16 %v360, %v358
    %v511 = vpack.c.b16 %v363, %v361
    %v512 = vpack.c.b16 %v364, %v362
    %v513 = vpack.c.b16 %v367, %v365
    %v514 = vpack.c.b16 %v368, %v366
    %v515 = vpack.c.b16 %v371, %v369
    %v516 = vpack.c.b16 %v372, %v370
    %v517 = vpack.c.b16 %v375, %v373
    %v518 = vpack.c.b16 %v376, %v374
    %v519 = vpack.c.b16 %v379, %v377
    %v520 = vpack.c.b16 %v380, %v378
    %v521 = vpack.c.b16 %v383, %v381
    %v522 = vpack.c.b16 %v384, %v382
    %v523 = vpack.c.b16 %v387, %v385
    %v524 = vpack.c.b16 %v388, %v386
    %v525 = vpack.c.b16 %v391, %v389
    %v526 = vpack.c.b16 %v392, %v390
    %v527 = vpack.c.b16 %v395, %v393
    %v528 = vpack.c.b16 %v396, %v394
    %v529 = vpack.c.b16 %v399, %v397
    %v530 = vpack.c.b16 %v400, %v398
    %v531 = vpack.c.b16 %v403, %v401
    %v532 = vpack.c.b16 %v404, %v402
    %v533 = vpack.c.b16 %v407, %v405
    %v534 = vpack.c.b16 %v408, %v406
    %v535 = vpack.c.b16 %v411, %v409
    %v536 = vpack.c.b16 %v412, %v410
    %v537 = vpack.c.b16 %v415, %v413
    %v538 = vpack.c.b16 %v416, %v414
    %v539 = vpack.c.b16 %v419, %v417
    %v540 = vpack.c.b16 %v420, %v418
    %v541 = vpack.c.b16 %v423, %v421
    %v542 = vpack.c.b16 %v424, %v422
    %v543 = vpack.c.b16 %v427, %v425
    %v544 = vpack.c.b16 %v428, %v426
    %v545 = vpack.c.b16 %v431, %v429
    %v546 = vpack.c.b16 %v432, %v430
    %v547 = vpack.c.b16 %v435, %v433
    %v548 = vpack.c.b16 %v436, %v434
    %v549 = vpack.c.b16 %v439, %v437
    %v550 = vpack.c.b16 %v440, %v438
    %v551 = vpack.c.b16 %v443, %v441
    %v552 = vpack.c.b16 %v444, %v442
    %v553 = vpack.c.b16 %v447, %v445
    %v554 = vpack.c.b16 %v448, %v446
    %v555 = vpack.c.b16 %v451, %v449
    %v556 = vpack.c.b16 %v452, %v450
    %v557 = vpack.c.b16 %v455, %v453
    %v558 = vpack.c.b16 %v456, %v454
    %v559 = vpack.c.b16 %v459, %v457
    %v560 = vpack.c.b16 %v460, %v458
    %v561 = vpack.c.b16 %v463, %v461
    %v562 = vpack.c.b16 %v464, %v462
    %v563 = vpack.c.b16 %v467, %v465
    %v564 = vpack.c.b16 %v468, %v466
    %661 = vmatprep.subr.bf16.mxu0 %v470
    %662 = vmatpush1.bf16.msra.mxu0 %v469
    %663 = vmatprep.subr.bf16.mxu0 %v472
    %664 = vmatpush1.bf16.msra.mxu0 %v471
    %665 = vmatprep.subr.bf16.mxu0 %v474
    %666 = vmatpush1.bf16.msra.mxu0 %v473
    %667 = vmatprep.subr.bf16.mxu0 %v476
    %668 = vmatpush1.bf16.msra.mxu0 %v475
    %669 = vmatprep.subr.bf16.mxu0 %v478
    %670 = vmatpush1.bf16.msra.mxu0 %v477
    %671 = vmatprep.subr.bf16.mxu0 %v480
    %672 = vmatpush1.bf16.msra.mxu0 %v479
    %673 = vmatprep.subr.bf16.mxu0 %v482
    %674 = vmatpush1.bf16.msra.mxu0 %v481
    %675 = vmatprep.subr.bf16.mxu0 %v484
    %676 = vmatpush1.bf16.msra.mxu0 %v483
    %677 = vmatprep.subr.bf16.mxu0 %v486
    %678 = vmatpush1.bf16.msra.mxu0 %v485
    %679 = vmatprep.subr.bf16.mxu0 %v488
    %680 = vmatpush1.bf16.msra.mxu0 %v487
    %681 = vmatprep.subr.bf16.mxu0 %v490
    %682 = vmatpush1.bf16.msra.mxu0 %v489
    %683 = vmatprep.subr.bf16.mxu0 %v492
    %684 = vmatpush1.bf16.msra.mxu0 %v491
    %685 = vmatprep.subr.bf16.mxu0 %v494
    %686 = vmatpush1.bf16.msra.mxu0 %v493
    %687 = vmatprep.subr.bf16.mxu0 %v496
    %688 = vmatpush1.bf16.msra.mxu0 %v495
    %689 = vmatprep.subr.bf16.mxu0 %v498
    %690 = vmatpush1.bf16.msra.mxu0 %v497
    %691 = vmatprep.subr.bf16.mxu0 %v500
    %692 = vmatpush1.bf16.msra.mxu0 %v499
    %693 = vmatprep.mubr.bf16.mxu0 %v68
    %694 = vmatmul.mubr.bf16.gmra.mrb[0].mxu0 %v67
    %v695 = vpop.f32.mrb[0].mxu0
    %v696 = vadd.f32 %v174, %v695
    %v697 = vpop.f32.mrb[0].mxu0
    %v698 = vadd.f32 %v178, %v697
    %v699 = vpop.f32.mrb[0].mxu0
    %v700 = vpop.f32.mrb[0].mxu0
    %701 = vdwg.mxu0
    %702 = vmatprep.subr.bf16.mxu0 %v502
    %703 = vmatpush1.bf16.msra.mxu0 %v501
    %704 = vmatprep.subr.bf16.mxu0 %v504
    %705 = vmatpush1.bf16.msra.mxu0 %v503
    %706 = vmatprep.subr.bf16.mxu0 %v506
    %707 = vmatpush1.bf16.msra.mxu0 %v505
    %708 = vmatprep.subr.bf16.mxu0 %v508
    %709 = vmatpush1.bf16.msra.mxu0 %v507
    %710 = vmatprep.subr.bf16.mxu0 %v510
    %711 = vmatpush1.bf16.msra.mxu0 %v509
    %712 = vmatprep.subr.bf16.mxu0 %v512
    %713 = vmatpush1.bf16.msra.mxu0 %v511
    %714 = vmatprep.subr.bf16.mxu0 %v514
    %715 = vmatpush1.bf16.msra.mxu0 %v513
    %716 = vmatprep.subr.bf16.mxu0 %v516
    %717 = vmatpush1.bf16.msra.mxu0 %v515
    %718 = vmatprep.subr.bf16.mxu0 %v518
    %719 = vmatpush1.bf16.msra.mxu0 %v517
    %720 = vmatprep.subr.bf16.mxu0 %v520
    %721 = vmatpush1.bf16.msra.mxu0 %v519
    %722 = vmatprep.subr.bf16.mxu0 %v522
    %723 = vmatpush1.bf16.msra.mxu0 %v521
    %724 = vmatprep.subr.bf16.mxu0 %v524
    %725 = vmatpush1.bf16.msra.mxu0 %v523
    %726 = vmatprep.subr.bf16.mxu0 %v526
    %727 = vmatpush1.bf16.msra.mxu0 %v525
    %728 = vmatprep.subr.bf16.mxu0 %v528
    %729 = vmatpush1.bf16.msra.mxu0 %v527
    %730 = vmatprep.subr.bf16.mxu0 %v530
    %731 = vmatpush1.bf16.msra.mxu0 %v529
    %732 = vmatprep.subr.bf16.mxu0 %v532
    %733 = vmatpush1.bf16.msra.mxu0 %v531
    %734 = vmatprep.mubr.bf16.mxu0 %v70
    %735 = vmatmul.mubr.bf16.gmra.mrb[0].mxu0 %v69
    %v736 = vpop.f32.mrb[0].mxu0
    %v737 = vadd.f32 %v696, %v736
    %v738 = vpop.f32.mrb[0].mxu0
    %v739 = vadd.f32 %v698, %v738
    %v740 = vpop.f32.mrb[0].mxu0
    %v741 = vpop.f32.mrb[0].mxu0
    %742 = vdwg.mxu0
    %743 = vmatprep.subr.bf16.mxu0 %v534
    %744 = vmatpush1.bf16.msra.mxu0 %v533
    %745 = vmatprep.subr.bf16.mxu0 %v536
    %746 = vmatpush1.bf16.msra.mxu0 %v535
    %747 = vmatprep.subr.bf16.mxu0 %v538
    %748 = vmatpush1.bf16.msra.mxu0 %v537
    %749 = vmatprep.subr.bf16.mxu0 %v540
    %750 = vmatpush1.bf16.msra.mxu0 %v539
    %751 = vmatprep.subr.bf16.mxu0 %v542
    %752 = vmatpush1.bf16.msra.mxu0 %v541
    %753 = vmatprep.subr.bf16.mxu0 %v544
    %754 = vmatpush1.bf16.msra.mxu0 %v543
    %755 = vmatprep.subr.bf16.mxu0 %v546
    %756 = vmatpush1.bf16.msra.mxu0 %v545
    %757 = vmatprep.subr.bf16.mxu0 %v548
    %758 = vmatpush1.bf16.msra.mxu0 %v547
    %759 = vmatprep.subr.bf16.mxu0 %v550
    %760 = vmatpush1.bf16.msra.mxu0 %v549
    %761 = vmatprep.subr.bf16.mxu0 %v552
    %762 = vmatpush1.bf16.msra.mxu0 %v551
    %763 = vmatprep.subr.bf16.mxu0 %v554
    %764 = vmatpush1.bf16.msra.mxu0 %v553
    %765 = vmatprep.subr.bf16.mxu0 %v556
    %766 = vmatpush1.bf16.msra.mxu0 %v555
    %767 = vmatprep.subr.bf16.mxu0 %v558
    %768 = vmatpush1.bf16.msra.mxu0 %v557
    %769 = vmatprep.subr.bf16.mxu0 %v560
    %770 = vmatpush1.bf16.msra.mxu0 %v559
    %771 = vmatprep.subr.bf16.mxu0 %v562
    %772 = vmatpush1.bf16.msra.mxu0 %v561
    %773 = vmatprep.subr.bf16.mxu0 %v564
    %774 = vmatpush1.bf16.msra.mxu0 %v563
    %775 = vmatprep.mubr.bf16.mxu0 %v72
    %776 = vmatmul.mubr.bf16.gmra.mrb[0].mxu0 %v71
    %v777 = vpop.f32.mrb[0].mxu0
    %v778 = vadd.f32 %v737, %v777
    %v779 = vpop.f32.mrb[0].mxu0
    %v780 = vadd.f32 %v739, %v779
    %v781 = vpop.f32.mrb[0].mxu0
    %v782 = vpop.f32.mrb[0].mxu0
    %783 = vdwg.mxu0
    %v784 = vmax.f32 %v778, 0.0
    %v785 = vmax.f32 %v780, 0.0
    %v786 = vpack.c.bf16 %v784, %v784
    %v787 = vpack.c.bf16 %v785, %v785
    %v788 = vld [vmem:[#allocation7] sm:$0xf]
    %v789 = vld [vmem:[#allocation7 + $0x4] sm:$0xf]
    %v790 = vld [vmem:[#allocation7 + $0x8] sm:$0xf]
    %v791 = vld [vmem:[#allocation7 + $0xc] sm:$0xf]
    %v792 = vld [vmem:[#allocation7 + $0x10] sm:$0xf]
    %v793 = vld [vmem:[#allocation7 + $0x14] sm:$0xf]
    %v794 = vld [vmem:[#allocation7 + $0x18] sm:$0xf]
    %v795 = vld [vmem:[#allocation7 + $0x1c] sm:$0xf]
    %v796 = vld [vmem:[#allocation7 + $0x20] sm:$0xf]
    %v797 = vld [vmem:[#allocation7 + $0x24] sm:$0xf]
    %v798 = vld [vmem:[#allocation7 + $0x28] sm:$0xf]
    %v799 = vld [vmem:[#allocation7 + $0x2c] sm:$0xf]
    %v800 = vld [vmem:[#allocation7 + $0x30] sm:$0xf]
    %v801 = vld [vmem:[#allocation7 + $0x34] sm:$0xf]
    %v802 = vld [vmem:[#allocation7 + $0x38] sm:$0xf]
    %v803 = vld [vmem:[#allocation7 + $0x3c] sm:$0xf]
    %v804 = vld [vmem:[#allocation7 + $0x40] sm:$0xf]
    %v805 = vld [vmem:[#allocation7 + $0x44] sm:$0xf]
    %v806 = vld [vmem:[#allocation7 + $0x48] sm:$0xf]
    %v807 = vld [vmem:[#allocation7 + $0x4c] sm:$0xf]
    %v808 = vld [vmem:[#allocation7 + $0x50] sm:$0xf]
    %v809 = vld [vmem:[#allocation7 + $0x54] sm:$0xf]
    %v810 = vld [vmem:[#allocation7 + $0x58] sm:$0xf]
    %v811 = vld [vmem:[#allocation7 + $0x5c] sm:$0xf]
    %v812 = vld [vmem:[#allocation7 + $0x60] sm:$0xf]
    %v813 = vld [vmem:[#allocation7 + $0x64] sm:$0xf]
    %v814 = vld [vmem:[#allocation7 + $0x68] sm:$0xf]
    %v815 = vld [vmem:[#allocation7 + $0x6c] sm:$0xf]
    %v816 = vld [vmem:[#allocation7 + $0x70] sm:$0xf]
    %v817 = vld [vmem:[#allocation7 + $0x74] sm:$0xf]
    %v818 = vld [vmem:[#allocation7 + $0x78] sm:$0xf]
    %v819 = vld [vmem:[#allocation7 + $0x7c] sm:$0xf]
    %v820 = vld [vmem:[%s4] sm:$0x1]
    %v822 = vlaneseq
    %v823 = vshrl.u32 %v822, 7
    %v824 = vsub.s32 0, %v823
    %v825 = vrot.slane %v820, %v824
    %v859 = vunpack.c.l.b16 %v788
    %v860 = vunpack.c.l.b16 %v789
    %v861 = vunpack.c.l.b16 %v790
    %v862 = vunpack.c.l.b16 %v791
    %v863 = vunpack.c.l.b16 %v792
    %v864 = vunpack.c.l.b16 %v793
    %v865 = vunpack.c.l.b16 %v794
    %v866 = vunpack.c.l.b16 %v795
    %v867 = vunpack.c.l.b16 %v796
    %v868 = vunpack.c.l.b16 %v797
    %v869 = vunpack.c.l.b16 %v798
    %v870 = vunpack.c.l.b16 %v799
    %v871 = vunpack.c.l.b16 %v800
    %v872 = vunpack.c.l.b16 %v801
    %v873 = vunpack.c.l.b16 %v802
    %v874 = vunpack.c.l.b16 %v803
    %v875 = vunpack.c.l.b16 %v804
    %v876 = vunpack.c.l.b16 %v805
    %v877 = vunpack.c.l.b16 %v806
    %v878 = vunpack.c.l.b16 %v807
    %v879 = vunpack.c.l.b16 %v808
    %v880 = vunpack.c.l.b16 %v809
    %v881 = vunpack.c.l.b16 %v810
    %v882 = vunpack.c.l.b16 %v811
    %v883 = vunpack.c.l.b16 %v812
    %v884 = vunpack.c.l.b16 %v813
    %v885 = vunpack.c.l.b16 %v814
    %v886 = vunpack.c.l.b16 %v815
    %v887 = vunpack.c.l.b16 %v816
    %v888 = vunpack.c.l.b16 %v817
    %v889 = vunpack.c.l.b16 %v818
    %v890 = vunpack.c.l.b16 %v819
    %v891 = vpack.c.b16 %v860, %v859
    %v892 = vpack.c.b16 %v862, %v861
    %v893 = vpack.c.b16 %v864, %v863
    %v894 = vpack.c.b16 %v866, %v865
    %v895 = vpack.c.b16 %v868, %v867
    %v896 = vpack.c.b16 %v870, %v869
    %v897 = vpack.c.b16 %v872, %v871
    %v898 = vpack.c.b16 %v874, %v873
    %v899 = vpack.c.b16 %v876, %v875
    %v900 = vpack.c.b16 %v878, %v877
    %v901 = vpack.c.b16 %v880, %v879
    %v902 = vpack.c.b16 %v882, %v881
    %v903 = vpack.c.b16 %v884, %v883
    %v904 = vpack.c.b16 %v886, %v885
    %v905 = vpack.c.b16 %v888, %v887
    %v906 = vpack.c.b16 %v890, %v889
    %923 = vmatprep.subr.bf16.mxu0 0
    %924 = vmatpush1.bf16.msra.mxu0 %v891
    %925 = vmatprep.subr.bf16.mxu0 0
    %926 = vmatpush1.bf16.msra.mxu0 %v892
    %927 = vmatprep.subr.bf16.mxu0 0
    %928 = vmatpush1.bf16.msra.mxu0 %v893
    %929 = vmatprep.subr.bf16.mxu0 0
    %930 = vmatpush1.bf16.msra.mxu0 %v894
    %931 = vmatprep.subr.bf16.mxu0 0
    %932 = vmatpush1.bf16.msra.mxu0 %v895
    %933 = vmatprep.subr.bf16.mxu0 0
    %934 = vmatpush1.bf16.msra.mxu0 %v896
    %935 = vmatprep.subr.bf16.mxu0 0
    %936 = vmatpush1.bf16.msra.mxu0 %v897
    %937 = vmatprep.subr.bf16.mxu0 0
    %938 = vmatpush1.bf16.msra.mxu0 %v898
    %939 = vmatprep.subr.bf16.mxu0 0
    %940 = vmatpush1.bf16.msra.mxu0 %v899
    %941 = vmatprep.subr.bf16.mxu0 0
    %942 = vmatpush1.bf16.msra.mxu0 %v900
    %943 = vmatprep.subr.bf16.mxu0 0
    %944 = vmatpush1.bf16.msra.mxu0 %v901
    %945 = vmatprep.subr.bf16.mxu0 0
    %946 = vmatpush1.bf16.msra.mxu0 %v902
    %947 = vmatprep.subr.bf16.mxu0 0
    %948 = vmatpush1.bf16.msra.mxu0 %v903
    %949 = vmatprep.subr.bf16.mxu0 0
    %950 = vmatpush1.bf16.msra.mxu0 %v904
    %951 = vmatprep.subr.bf16.mxu0 0
    %952 = vmatpush1.bf16.msra.mxu0 %v905
    %953 = vmatprep.subr.bf16.mxu0 0
    %954 = vmatpush1.bf16.msra.mxu0 %v906
    %955 = vmatprep.mubr.bf16.mxu0 %v787
    %956 = vmatmul.mubr.bf16.gmra.mrb[0].mxu0 %v786
    %v957 = vpop.f32.mrb[0].mxu0
    %v958 = vadd.f32 %v825, %v957
    %v959 = vpop.f32.mrb[0].mxu0
    %v960 = vpop.f32.mrb[0].mxu0
    %v961 = vpop.f32.mrb[0].mxu0
    %962 = vdwg.mxu0
    %963 = vmax.xlane.f32.xlu0 %v958
    %v964 = vpop.xlane.xlu0 %963
    %v965 = vsub.f32 %v958, %v964
    %v966 = vmul.f32 %v965, 1.442695
    %v967 = vpow.pop %v966
    %968 = vadd.xlane.f32.xlu0 %v967
    %v969 = vpop.xlane.xlu0 %968
    %v970 = vlog2.pop %v969
    %v971 = vmul.f32 %v970, 0.6931472
    %v972 = vsub.f32 %v965, %v971
    %973 = vst [vmem:[#allocation8] sm:$0xff] %v972
    // Predicated region
    $region34: #{tpu_custom_call.1} parent=1 // pred_check
      _
    $region35: #{tpu_custom_call.1} parent=1 // pred_check_branch
      %975 = sbr.rel (0) target = $region37
    $region36: #{tpu_custom_call.1} parent=1 // pred_region
      %s977 = ssub.s32 128, 128
      %978 = vsyncadd [#allocation4], %s977
      %s980 = sshll.u32 [#allocation8], 4
      %s981 = int_to_ptr.vmem [resolvable:$true] %s980
      %983 = dma.vmem_to_hbm [thread:$0]  %s981, 128, %s5, [#allocation4]
    $region37: #{tpu_custom_call.1} parent=1 // pred_fallthru
      _
    // Predicated region
    $region38: #{tpu_custom_call.1} parent=1 // pred_check
      _
    $region39: #{tpu_custom_call.1} parent=1 // pred_check_branch
      %985 = sbr.rel (0) target = $region41
    $region40: #{tpu_custom_call.1} parent=1 // pred_region
      %986 = dma.done [#allocation4], 128
    $region41: #{tpu_custom_call.1} parent=1 // pred_fallthru
      _
    %987 = vsyncpa [#allocation3], 1
    %988 = vsyncpa [#allocation6], 1
    %989 = vsyncpa [#allocation4], 1

</llo_original>
